<compile_context>
chip_gen: v5e
topology: v5e:2x2
jax: 0.10.0
libtpu: 0.0.40
codegen_flags: <defaults>
</compile_context>

<pallas_src>
import functools

import jax
import jax.numpy as jnp
import numpy as np
from jax import lax
from jax.experimental import pallas as pl
from jax.experimental.pallas import tpu as pltpu

EPS = 1e-5  # torch.nn.BatchNorm2d default eps


# ----------------------------- in-kernel helpers -----------------------------

def _bn_train_packed(y, gamma_t, beta_t, bsum, inv_m):
  """Training-mode BatchNorm on a lane-packed (R, Wo*C) slab.

  Per-channel batch statistics (biased variance, eps=1e-5), two-pass
  (mean, then centered sum of squares), all in f32.  `bsum` is the 0/1
  channel sum-and-replicate matrix; `gamma_t`/`beta_t` are already tiled to
  the packed lane layout in the wrapper.
  """
  mean_t = jnp.sum(jnp.dot(y, bsum, preferred_element_type=jnp.float32),
                   axis=0, keepdims=True) * inv_m
  yc = y - mean_t
  var_t = jnp.sum(jnp.dot(yc * yc, bsum, preferred_element_type=jnp.float32),
                  axis=0, keepdims=True) * inv_m
  return yc * (gamma_t * lax.rsqrt(var_t + EPS)) + beta_t


def _conv3x3_packed(act_bf16, s_ref, a_ref):
  """3x3 conv in the lane-packed layout as 3 row-select + 3 banded matmuls.

  act_bf16 : (R_in, W_in*Cin)        bf16 activation (lanes = width*channels)
  s_ref    : (3, R_out, R_in)        bf16 0/1 row selection (ky taps, H stride,
                                     zero padding at image boundaries)
  a_ref    : (3, W_in*Cin, Wo*Cout)  bf16 banded weights (kx taps, W stride,
                                     W padding folded into the band structure)
  Returns (f32 accumulator, bf16 center rows) — the ky==1 row-selected
  activation is reused by the 1x1 shortcut conv.
  """
  acc = None
  center = None
  for ky in range(3):
    rows = jnp.dot(s_ref[ky], act_bf16,
                   preferred_element_type=jnp.float32).astype(jnp.bfloat16)
    part = jnp.dot(rows, a_ref[ky], preferred_element_type=jnp.float32)
    acc = part if acc is None else acc + part
    if ky == 1:
      center = rows
  return acc, center


# ---------------------------------- kernel -----------------------------------

def basic_block_kernel(*refs, has_sc_conv, inv_m):
  """out = relu(bn2(conv2(relu(bn1(conv1(x))))) + shortcut(x)) — fully fused."""
  if has_sc_conv:
    (x_ref, s1_ref, a1_ref, g1_ref, b1_ref,
     s2_ref, a2_ref, g2_ref, b2_ref, bsum_ref,
     asc_ref, gsc_ref, bsc_ref, out_ref) = refs
  else:
    (x_ref, s1_ref, a1_ref, g1_ref, b1_ref,
     s2_ref, a2_ref, g2_ref, b2_ref, bsum_ref, out_ref) = refs

  x_f32 = x_ref[...]                        # (N*H, W*Cin) f32, loaded once
  x_bf = x_f32.astype(jnp.bfloat16)         # single bf16 cast of x
  bsum = bsum_ref[...]                      # (Wo*P, Wo*P) f32, 0/1

  # conv1 -> bn1 -> relu          (h1 never leaves VMEM / registers)
  y1, x_center = _conv3x3_packed(x_bf, s1_ref, a1_ref)
  h1 = jnp.maximum(
      _bn_train_packed(y1, g1_ref[...], b1_ref[...], bsum, inv_m), 0.0)

  # conv2 (stride 1) -> bn2
  y2, _ = _conv3x3_packed(h1.astype(jnp.bfloat16), s2_ref, a2_ref)
  main = _bn_train_packed(y2, g2_ref[...], b2_ref[...], bsum, inv_m)

  # shortcut: identity, or 1x1 stride-s conv + bn (reuses the center rows)
  if has_sc_conv:
    sc = jnp.dot(x_center, asc_ref[...], preferred_element_type=jnp.float32)
    sc = _bn_train_packed(sc, gsc_ref[...], bsc_ref[...], bsum, inv_m)
  else:
    sc = x_f32                              # Cin == P, stride == 1, exact f32 add

  # Lane-dense (N*Ho, Wo*P) output slab — unmasked full-width stores.
  out_ref[...] = jnp.maximum(main + sc, 0.0)


# ------------------------- wrapper-side constant packing ----------------------

def _row_select_mats(n, h, ho, stride):
  """(3, n*ho, n*h) 0/1 matrices: row (i, ho') of S[ky] picks input row
  (i, stride*ho' + ky - 1); out-of-image rows are all-zero (H zero padding)."""
  s = np.zeros((3, n * ho, n * h), np.float32)
  for ky in range(3):
    for i in range(n):
      for j in range(ho):
        r = stride * j + ky - 1
        if 0 <= r < h:
          s[ky, i * ho + j, i * h + r] = 1.0
  return s


def _banded_conv_weights(w_hwio, w_in, wo, stride):
  """(3, w_in*Cin, wo*Cout) banded matrices folding the kx taps, W stride and
  W zero padding of a 3x3 conv into the matmul weights."""
  kx_sel = np.zeros((3, w_in, wo), np.float32)
  for kx in range(3):
    for j in range(wo):
      w = stride * j + kx - 1
      if 0 <= w < w_in:
        kx_sel[kx, w, j] = 1.0
  cin, cout = w_hwio.shape[2], w_hwio.shape[3]
  a = jnp.einsum("xwj,yxcp->ywcjp", kx_sel, w_hwio)
  return a.reshape(3, w_in * cin, wo * cout)


def _banded_shortcut_weights(w_cp, w_in, wo, stride):
  """(w_in*Cin, wo*Cout) banded matrix for the 1x1 stride-s shortcut conv."""
  sel = np.zeros((w_in, wo), np.float32)
  for j in range(wo):
    sel[stride * j, j] = 1.0
  cin, cout = w_cp.shape
  a = jnp.einsum("wj,cp->wcjp", sel, w_cp)
  return a.reshape(w_in * cin, wo * cout)


# ----------------------------------- wrapper -----------------------------------

def _basic_block_impl(x_nchw, params, *, stride):
  # NCHW -> lane-packed (N*H, W*Cin).  (The NCHW<->packed transposes live at
  # the PyTorch-facing boundary; a fused multi-block pipeline would keep the
  # packed layout between blocks.)
  x = jnp.transpose(x_nchw, (0, 2, 3, 1)).astype(jnp.float32)
  N, H, W, Cin = x.shape
  P = params["w1"].shape[-1]
  Ho = (H - 1) // stride + 1
  Wo = (W - 1) // stride + 1
  has_sc_conv = (stride != 1) or (Cin != P)

  x2d = x.reshape(N * H, W * Cin)
  L_in, L_out, R = W * Cin, Wo * P, N * Ho

  s1 = jnp.asarray(_row_select_mats(N, H, Ho, stride), jnp.bfloat16)
  s2 = jnp.asarray(_row_select_mats(N, Ho, Ho, 1), jnp.bfloat16)
  a1 = _banded_conv_weights(params["w1"], W, Wo, stride).astype(jnp.bfloat16)
  a2 = _banded_conv_weights(params["w2"], Wo, Wo, 1).astype(jnp.bfloat16)
  # 0/1 channel sum-and-replicate matrix for BN in the packed layout.
  bsum = jnp.asarray(np.tile(np.eye(P, dtype=np.float32), (Wo, Wo)))

  def tile_ch(v):  # (P,) -> (1, Wo*P), lane wo*P+p carries channel p
    return jnp.tile(jnp.reshape(v, (1, P)).astype(jnp.float32), (1, Wo))

  args = [x2d, s1, a1, tile_ch(params["g1"]), tile_ch(params["b1"]),
          s2, a2, tile_ch(params["g2"]), tile_ch(params["b2"]), bsum]
  if has_sc_conv:
    asc = _banded_shortcut_weights(params["ws"], W, Wo,
                                   stride).astype(jnp.bfloat16)
    args += [asc, tile_ch(params["gs"]), tile_ch(params["bs"])]

  kern = functools.partial(basic_block_kernel, has_sc_conv=has_sc_conv,
                           inv_m=1.0 / float(N * Ho * Wo))

  vmem = lambda: pl.BlockSpec(memory_space=pltpu.MemorySpace.VMEM)
  flops = 2 * R * (3 * (N * H) * L_in + 3 * L_in * L_out
                   + 3 * R * L_out + 3 * L_out * L_out
                   + (L_in * L_out if has_sc_conv else 0)
                   + 6 * L_out * L_out)
  bytes_accessed = (4 * (x2d.size + R * L_out + bsum.size)
                    + 2 * (s1.size + s2.size + a1.size + a2.size) + 4 * 6 * L_out)

  out2d = pl.pallas_call(
      kern,
      out_shape=jax.ShapeDtypeStruct((R, L_out), jnp.float32),
      in_specs=[vmem() for _ in args],
      out_specs=vmem(),
      compiler_params=pltpu.CompilerParams(vmem_limit_bytes=32 * 1024 * 1024),
      cost_estimate=pl.CostEstimate(flops=flops, transcendentals=3 * L_out,
                                    bytes_accessed=bytes_accessed),
  )(*args)

  out = out2d.reshape(N, Ho, Wo, P)
  return jnp.transpose(out, (0, 3, 1, 2))                 # packed -> NCHW


_jit_impl = jax.jit(_basic_block_impl, static_argnames=("stride",))


def basic_block_forward(x_nchw, params, stride=1):
  """BasicBlock forward. x: (N, Cin, H, W) f32 -> (N, P, Ho, Wo) f32."""
  return jax.block_until_ready(_jit_impl(x_nchw, params, stride=stride))


# ------------------------------ pure-JAX reference ----------------------------

def _reference(x_nchw, params, stride=1, matmul_dtype=jnp.float32):
  """PyTorch-semantics reference; matmul inputs optionally cast to bf16."""
  x = jnp.transpose(x_nchw, (0, 2, 3, 1)).astype(jnp.float32)
  Cin = x.shape[-1]
  P = params["w1"].shape[-1]

  def conv3x3_ref(inp, w_hwio, s):
    return lax.conv_general_dilated(
        inp.astype(matmul_dtype), w_hwio.astype(matmul_dtype), (s, s),
        ((1, 1), (1, 1)), dimension_numbers=("NHWC", "HWIO", "NHWC"),
        preferred_element_type=jnp.float32)

  def bn_ref(y, g, b):
    mu = jnp.mean(y, axis=(0, 1, 2), keepdims=True)
    var = jnp.mean((y - mu) ** 2, axis=(0, 1, 2), keepdims=True)
    return (y - mu) * lax.rsqrt(var + EPS) * g.reshape(1, 1, 1, -1) \
        + b.reshape(1, 1, 1, -1)

  h = jax.nn.relu(bn_ref(conv3x3_ref(x, params["w1"], stride),
                         params["g1"], params["b1"]))
  out = bn_ref(conv3x3_ref(h, params["w2"], 1), params["g2"], params["b2"])
  if stride != 1 or Cin != P:
    xs = x[:, ::stride, ::stride, :]
    sc = jnp.dot(xs.reshape(-1, Cin).astype(matmul_dtype),
                 params["ws"].astype(matmul_dtype),
                 preferred_element_type=jnp.float32)
    sc = bn_ref(sc.reshape(xs.shape[:3] + (P,)), params["gs"], params["bs"])
  else:
    sc = x
  return jnp.transpose(jax.nn.relu(out + sc), (0, 3, 1, 2))


# ----------------------------------- main --------------------------------------

if __name__ == "__main__":
  root = jax.random.PRNGKey(0)

  # (N, Cin, P, H, W, stride): 1x1-conv+bn shortcut config, then identity config.
  configs = [(2, 4, 8, 16, 16, 1), (2, 8, 8, 16, 16, 1)]

  for idx, (N, Cin, P, H, W, stride) in enumerate(configs):
    ks = jax.random.split(jax.random.fold_in(root, idx), 10)
    x = jax.random.normal(ks[0], (N, Cin, H, W), jnp.float32)

    params = dict(
        w1=0.1 * jax.random.normal(ks[1], (3, 3, Cin, P), jnp.float32),  # HWIO
        g1=1.0 + 0.1 * jax.random.normal(ks[2], (P,), jnp.float32),
        b1=0.1 * jax.random.normal(ks[3], (P,), jnp.float32),
        w2=0.1 * jax.random.normal(ks[4], (3, 3, P, P), jnp.float32),
        g2=1.0 + 0.1 * jax.random.normal(ks[5], (P,), jnp.float32),
        b2=0.1 * jax.random.normal(ks[6], (P,), jnp.float32),
        ws=0.1 * jax.random.normal(ks[7], (Cin, P), jnp.float32),
        gs=1.0 + 0.1 * jax.random.normal(ks[8], (P,), jnp.float32),
        bs=0.1 * jax.random.normal(ks[9], (P,), jnp.float32),
    )

    out = np.asarray(basic_block_forward(x, params, stride=stride))

    # Tight check vs. a reference with matched matmul precision (bf16 inputs,
    # f32 accumulation): validates the fused/packed kernel structure.
    ref_matched = np.asarray(_reference(x, params, stride, jnp.bfloat16))
    np.testing.assert_allclose(out, ref_matched, rtol=1e-2, atol=1e-2)

    # Looser check vs. the pure-f32 PyTorch-semantics reference: bounds the
    # bf16-MXU drift.
    ref_f32 = np.asarray(_reference(x, params, stride, jnp.float32))
    np.testing.assert_allclose(out, ref_f32, rtol=1e-1, atol=1e-1)

  print("KERNEL_OK")
</pallas_src>

<mosaic_0001>
module attributes {stable_mosaic.version = 11 : i64} {
  func.func @basic_block_kernel(%arg0: memref<32x64xf32, #tpu.memory_space<vmem>>, %arg1: memref<3x32x32xbf16, #tpu.memory_space<vmem>>, %arg2: memref<3x64x128xbf16, #tpu.memory_space<vmem>>, %arg3: memref<1x128xf32, #tpu.memory_space<vmem>>, %arg4: memref<1x128xf32, #tpu.memory_space<vmem>>, %arg5: memref<3x32x32xbf16, #tpu.memory_space<vmem>>, %arg6: memref<3x128x128xbf16, #tpu.memory_space<vmem>>, %arg7: memref<1x128xf32, #tpu.memory_space<vmem>>, %arg8: memref<1x128xf32, #tpu.memory_space<vmem>>, %arg9: memref<128x128xf32, #tpu.memory_space<vmem>>, %arg10: memref<64x128xbf16, #tpu.memory_space<vmem>>, %arg11: memref<1x128xf32, #tpu.memory_space<vmem>>, %arg12: memref<1x128xf32, #tpu.memory_space<vmem>>, %arg13: memref<32x128xf32, #tpu.memory_space<vmem>>) attributes {dimension_semantics = [], scalar_prefetch = 0 : i64, scratch_operands = 0 : i64, tpu.core_type = #tpu.core_type<tc>} {
    %c0 = arith.constant 0 : index
    %c0_0 = arith.constant 0 : index
    %0 = vector.load %arg0[%c0, %c0_0] : memref<32x64xf32, #tpu.memory_space<vmem>>, vector<32x64xf32>
    %1 = arith.truncf %0 : vector<32x64xf32> to vector<32x64xbf16>
    %c0_1 = arith.constant 0 : index
    %c0_2 = arith.constant 0 : index
    %2 = vector.load %arg9[%c0_1, %c0_2] : memref<128x128xf32, #tpu.memory_space<vmem>>, vector<128x128xf32>
    %c0_3 = arith.constant 0 : index
    %c0_4 = arith.constant 0 : index
    %c0_5 = arith.constant 0 : index
    %3 = vector.load %arg1[%c0_3, %c0_4, %c0_5] : memref<3x32x32xbf16, #tpu.memory_space<vmem>>, vector<1x32x32xbf16>
    %4 = vector.shape_cast %3 : vector<1x32x32xbf16> to vector<32x32xbf16>
    %cst = arith.constant dense<0.000000e+00> : vector<32x64xf32>
    %5 = tpu.matmul %4, %1, %cst {dimension_numbers = #tpu.dot_dimension_numbers<[1], [0], [0], [1], [0, 0, 1, 1], [], []>} : vector<32x32xbf16>, vector<32x64xbf16>, vector<32x64xf32> -> vector<32x64xf32>
    %6 = arith.truncf %5 : vector<32x64xf32> to vector<32x64xbf16>
    %c0_6 = arith.constant 0 : index
    %c0_7 = arith.constant 0 : index
    %c0_8 = arith.constant 0 : index
    %7 = vector.load %arg2[%c0_6, %c0_7, %c0_8] : memref<3x64x128xbf16, #tpu.memory_space<vmem>>, vector<1x64x128xbf16>
    %8 = vector.shape_cast %7 : vector<1x64x128xbf16> to vector<64x128xbf16>
    %cst_9 = arith.constant dense<0.000000e+00> : vector<32x128xf32>
    %9 = tpu.matmul %6, %8, %cst_9 {dimension_numbers = #tpu.dot_dimension_numbers<[1], [0], [0], [1], [0, 0, 1, 1], [], []>} : vector<32x64xbf16>, vector<64x128xbf16>, vector<32x128xf32> -> vector<32x128xf32>
    %c1 = arith.constant 1 : index
    %c0_10 = arith.constant 0 : index
    %c0_11 = arith.constant 0 : index
    %10 = vector.load %arg1[%c1, %c0_10, %c0_11] : memref<3x32x32xbf16, #tpu.memory_space<vmem>>, vector<1x32x32xbf16>
    %11 = vector.shape_cast %10 : vector<1x32x32xbf16> to vector<32x32xbf16>
    %cst_12 = arith.constant dense<0.000000e+00> : vector<32x64xf32>
    %12 = tpu.matmul %11, %1, %cst_12 {dimension_numbers = #tpu.dot_dimension_numbers<[1], [0], [0], [1], [0, 0, 1, 1], [], []>} : vector<32x32xbf16>, vector<32x64xbf16>, vector<32x64xf32> -> vector<32x64xf32>
    %13 = arith.truncf %12 : vector<32x64xf32> to vector<32x64xbf16>
    %c1_13 = arith.constant 1 : index
    %c0_14 = arith.constant 0 : index
    %c0_15 = arith.constant 0 : index
    %14 = vector.load %arg2[%c1_13, %c0_14, %c0_15] : memref<3x64x128xbf16, #tpu.memory_space<vmem>>, vector<1x64x128xbf16>
    %15 = vector.shape_cast %14 : vector<1x64x128xbf16> to vector<64x128xbf16>
    %cst_16 = arith.constant dense<0.000000e+00> : vector<32x128xf32>
    %16 = tpu.matmul %13, %15, %cst_16 {dimension_numbers = #tpu.dot_dimension_numbers<[1], [0], [0], [1], [0, 0, 1, 1], [], []>} : vector<32x64xbf16>, vector<64x128xbf16>, vector<32x128xf32> -> vector<32x128xf32>
    %17 = arith.addf %9, %16 : vector<32x128xf32>
    %c2 = arith.constant 2 : index
    %c0_17 = arith.constant 0 : index
    %c0_18 = arith.constant 0 : index
    %18 = vector.load %arg1[%c2, %c0_17, %c0_18] : memref<3x32x32xbf16, #tpu.memory_space<vmem>>, vector<1x32x32xbf16>
    %19 = vector.shape_cast %18 : vector<1x32x32xbf16> to vector<32x32xbf16>
    %cst_19 = arith.constant dense<0.000000e+00> : vector<32x64xf32>
    %20 = tpu.matmul %19, %1, %cst_19 {dimension_numbers = #tpu.dot_dimension_numbers<[1], [0], [0], [1], [0, 0, 1, 1], [], []>} : vector<32x32xbf16>, vector<32x64xbf16>, vector<32x64xf32> -> vector<32x64xf32>
    %21 = arith.truncf %20 : vector<32x64xf32> to vector<32x64xbf16>
    %c2_20 = arith.constant 2 : index
    %c0_21 = arith.constant 0 : index
    %c0_22 = arith.constant 0 : index
    %22 = vector.load %arg2[%c2_20, %c0_21, %c0_22] : memref<3x64x128xbf16, #tpu.memory_space<vmem>>, vector<1x64x128xbf16>
    %23 = vector.shape_cast %22 : vector<1x64x128xbf16> to vector<64x128xbf16>
    %cst_23 = arith.constant dense<0.000000e+00> : vector<32x128xf32>
    %24 = tpu.matmul %21, %23, %cst_23 {dimension_numbers = #tpu.dot_dimension_numbers<[1], [0], [0], [1], [0, 0, 1, 1], [], []>} : vector<32x64xbf16>, vector<64x128xbf16>, vector<32x128xf32> -> vector<32x128xf32>
    %25 = arith.addf %17, %24 : vector<32x128xf32>
    %c0_24 = arith.constant 0 : index
    %c0_25 = arith.constant 0 : index
    %26 = vector.load %arg3[%c0_24, %c0_25] : memref<1x128xf32, #tpu.memory_space<vmem>>, vector<1x128xf32>
    %c0_26 = arith.constant 0 : index
    %c0_27 = arith.constant 0 : index
    %27 = vector.load %arg4[%c0_26, %c0_27] : memref<1x128xf32, #tpu.memory_space<vmem>>, vector<1x128xf32>
    %cst_28 = arith.constant dense<0.000000e+00> : vector<32x128xf32>
    %28 = tpu.matmul %25, %2, %cst_28 {dimension_numbers = #tpu.dot_dimension_numbers<[1], [0], [0], [1], [0, 0, 1, 1], [], []>} : vector<32x128xf32>, vector<128x128xf32>, vector<32x128xf32> -> vector<32x128xf32>
    %cst_29 = arith.constant dense<0.000000e+00> : vector<128xf32>
    %29 = vector.multi_reduction <add>, %28, %cst_29 [0] : vector<32x128xf32> to vector<128xf32>
    %30 = vector.shape_cast %29 : vector<128xf32> to vector<1x128xf32>
    %cst_30 = arith.constant 0.001953125 : f32
    %31 = vector.broadcast %cst_30 : f32 to vector<1x128xf32>
    %32 = arith.mulf %30, %31 : vector<1x128xf32>
    %33 = vector.broadcast %32 : vector<1x128xf32> to vector<32x128xf32>
    %34 = arith.subf %25, %33 : vector<32x128xf32>
    %35 = arith.mulf %34, %34 : vector<32x128xf32>
    %cst_31 = arith.constant dense<0.000000e+00> : vector<32x128xf32>
    %36 = tpu.matmul %35, %2, %cst_31 {dimension_numbers = #tpu.dot_dimension_numbers<[1], [0], [0], [1], [0, 0, 1, 1], [], []>} : vector<32x128xf32>, vector<128x128xf32>, vector<32x128xf32> -> vector<32x128xf32>
    %cst_32 = arith.constant dense<0.000000e+00> : vector<128xf32>
    %37 = vector.multi_reduction <add>, %36, %cst_32 [0] : vector<32x128xf32> to vector<128xf32>
    %38 = vector.shape_cast %37 : vector<128xf32> to vector<1x128xf32>
    %cst_33 = arith.constant 0.001953125 : f32
    %39 = vector.broadcast %cst_33 : f32 to vector<1x128xf32>
    %40 = arith.mulf %38, %39 : vector<1x128xf32>
    %cst_34 = arith.constant 9.99999974E-6 : f32
    %41 = vector.broadcast %cst_34 : f32 to vector<1x128xf32>
    %42 = arith.addf %40, %41 : vector<1x128xf32>
    %43 = math.rsqrt %42 : vector<1x128xf32>
    %44 = arith.mulf %26, %43 : vector<1x128xf32>
    %45 = vector.broadcast %44 : vector<1x128xf32> to vector<32x128xf32>
    %46 = arith.mulf %34, %45 : vector<32x128xf32>
    %47 = vector.broadcast %27 : vector<1x128xf32> to vector<32x128xf32>
    %48 = arith.addf %46, %47 : vector<32x128xf32>
    %cst_35 = arith.constant 0.000000e+00 : f32
    %49 = vector.broadcast %cst_35 : f32 to vector<32x128xf32>
    %50 = arith.maximumf %48, %49 : vector<32x128xf32>
    %51 = arith.truncf %50 : vector<32x128xf32> to vector<32x128xbf16>
    %c0_36 = arith.constant 0 : index
    %c0_37 = arith.constant 0 : index
    %c0_38 = arith.constant 0 : index
    %52 = vector.load %arg5[%c0_36, %c0_37, %c0_38] : memref<3x32x32xbf16, #tpu.memory_space<vmem>>, vector<1x32x32xbf16>
    %53 = vector.shape_cast %52 : vector<1x32x32xbf16> to vector<32x32xbf16>
    %cst_39 = arith.constant dense<0.000000e+00> : vector<32x128xf32>
    %54 = tpu.matmul %53, %51, %cst_39 {dimension_numbers = #tpu.dot_dimension_numbers<[1], [0], [0], [1], [0, 0, 1, 1], [], []>} : vector<32x32xbf16>, vector<32x128xbf16>, vector<32x128xf32> -> vector<32x128xf32>
    %55 = arith.truncf %54 : vector<32x128xf32> to vector<32x128xbf16>
    %c0_40 = arith.constant 0 : index
    %c0_41 = arith.constant 0 : index
    %c0_42 = arith.constant 0 : index
    %56 = vector.load %arg6[%c0_40, %c0_41, %c0_42] : memref<3x128x128xbf16, #tpu.memory_space<vmem>>, vector<1x128x128xbf16>
    %57 = vector.shape_cast %56 : vector<1x128x128xbf16> to vector<128x128xbf16>
    %cst_43 = arith.constant dense<0.000000e+00> : vector<32x128xf32>
    %58 = tpu.matmul %55, %57, %cst_43 {dimension_numbers = #tpu.dot_dimension_numbers<[1], [0], [0], [1], [0, 0, 1, 1], [], []>} : vector<32x128xbf16>, vector<128x128xbf16>, vector<32x128xf32> -> vector<32x128xf32>
    %c1_44 = arith.constant 1 : index
    %c0_45 = arith.constant 0 : index
    %c0_46 = arith.constant 0 : index
    %59 = vector.load %arg5[%c1_44, %c0_45, %c0_46] : memref<3x32x32xbf16, #tpu.memory_space<vmem>>, vector<1x32x32xbf16>
    %60 = vector.shape_cast %59 : vector<1x32x32xbf16> to vector<32x32xbf16>
    %cst_47 = arith.constant dense<0.000000e+00> : vector<32x128xf32>
    %61 = tpu.matmul %60, %51, %cst_47 {dimension_numbers = #tpu.dot_dimension_numbers<[1], [0], [0], [1], [0, 0, 1, 1], [], []>} : vector<32x32xbf16>, vector<32x128xbf16>, vector<32x128xf32> -> vector<32x128xf32>
    %62 = arith.truncf %61 : vector<32x128xf32> to vector<32x128xbf16>
    %c1_48 = arith.constant 1 : index
    %c0_49 = arith.constant 0 : index
    %c0_50 = arith.constant 0 : index
    %63 = vector.load %arg6[%c1_48, %c0_49, %c0_50] : memref<3x128x128xbf16, #tpu.memory_space<vmem>>, vector<1x128x128xbf16>
    %64 = vector.shape_cast %63 : vector<1x128x128xbf16> to vector<128x128xbf16>
    %cst_51 = arith.constant dense<0.000000e+00> : vector<32x128xf32>
    %65 = tpu.matmul %62, %64, %cst_51 {dimension_numbers = #tpu.dot_dimension_numbers<[1], [0], [0], [1], [0, 0, 1, 1], [], []>} : vector<32x128xbf16>, vector<128x128xbf16>, vector<32x128xf32> -> vector<32x128xf32>
    %66 = arith.addf %58, %65 : vector<32x128xf32>
    %c2_52 = arith.constant 2 : index
    %c0_53 = arith.constant 0 : index
    %c0_54 = arith.constant 0 : index
    %67 = vector.load %arg5[%c2_52, %c0_53, %c0_54] : memref<3x32x32xbf16, #tpu.memory_space<vmem>>, vector<1x32x32xbf16>
    %68 = vector.shape_cast %67 : vector<1x32x32xbf16> to vector<32x32xbf16>
    %cst_55 = arith.constant dense<0.000000e+00> : vector<32x128xf32>
    %69 = tpu.matmul %68, %51, %cst_55 {dimension_numbers = #tpu.dot_dimension_numbers<[1], [0], [0], [1], [0, 0, 1, 1], [], []>} : vector<32x32xbf16>, vector<32x128xbf16>, vector<32x128xf32> -> vector<32x128xf32>
    %70 = arith.truncf %69 : vector<32x128xf32> to vector<32x128xbf16>
    %c2_56 = arith.constant 2 : index
    %c0_57 = arith.constant 0 : index
    %c0_58 = arith.constant 0 : index
    %71 = vector.load %arg6[%c2_56, %c0_57, %c0_58] : memref<3x128x128xbf16, #tpu.memory_space<vmem>>, vector<1x128x128xbf16>
    %72 = vector.shape_cast %71 : vector<1x128x128xbf16> to vector<128x128xbf16>
    %cst_59 = arith.constant dense<0.000000e+00> : vector<32x128xf32>
    %73 = tpu.matmul %70, %72, %cst_59 {dimension_numbers = #tpu.dot_dimension_numbers<[1], [0], [0], [1], [0, 0, 1, 1], [], []>} : vector<32x128xbf16>, vector<128x128xbf16>, vector<32x128xf32> -> vector<32x128xf32>
    %74 = arith.addf %66, %73 : vector<32x128xf32>
    %c0_60 = arith.constant 0 : index
    %c0_61 = arith.constant 0 : index
    %75 = vector.load %arg7[%c0_60, %c0_61] : memref<1x128xf32, #tpu.memory_space<vmem>>, vector<1x128xf32>
    %c0_62 = arith.constant 0 : index
    %c0_63 = arith.constant 0 : index
    %76 = vector.load %arg8[%c0_62, %c0_63] : memref<1x128xf32, #tpu.memory_space<vmem>>, vector<1x128xf32>
    %cst_64 = arith.constant dense<0.000000e+00> : vector<32x128xf32>
    %77 = tpu.matmul %74, %2, %cst_64 {dimension_numbers = #tpu.dot_dimension_numbers<[1], [0], [0], [1], [0, 0, 1, 1], [], []>} : vector<32x128xf32>, vector<128x128xf32>, vector<32x128xf32> -> vector<32x128xf32>
    %cst_65 = arith.constant dense<0.000000e+00> : vector<128xf32>
    %78 = vector.multi_reduction <add>, %77, %cst_65 [0] : vector<32x128xf32> to vector<128xf32>
    %79 = vector.shape_cast %78 : vector<128xf32> to vector<1x128xf32>
    %cst_66 = arith.constant 0.001953125 : f32
    %80 = vector.broadcast %cst_66 : f32 to vector<1x128xf32>
    %81 = arith.mulf %79, %80 : vector<1x128xf32>
    %82 = vector.broadcast %81 : vector<1x128xf32> to vector<32x128xf32>
    %83 = arith.subf %74, %82 : vector<32x128xf32>
    %84 = arith.mulf %83, %83 : vector<32x128xf32>
    %cst_67 = arith.constant dense<0.000000e+00> : vector<32x128xf32>
    %85 = tpu.matmul %84, %2, %cst_67 {dimension_numbers = #tpu.dot_dimension_numbers<[1], [0], [0], [1], [0, 0, 1, 1], [], []>} : vector<32x128xf32>, vector<128x128xf32>, vector<32x128xf32> -> vector<32x128xf32>
    %cst_68 = arith.constant dense<0.000000e+00> : vector<128xf32>
    %86 = vector.multi_reduction <add>, %85, %cst_68 [0] : vector<32x128xf32> to vector<128xf32>
    %87 = vector.shape_cast %86 : vector<128xf32> to vector<1x128xf32>
    %cst_69 = arith.constant 0.001953125 : f32
    %88 = vector.broadcast %cst_69 : f32 to vector<1x128xf32>
    %89 = arith.mulf %87, %88 : vector<1x128xf32>
    %cst_70 = arith.constant 9.99999974E-6 : f32
    %90 = vector.broadcast %cst_70 : f32 to vector<1x128xf32>
    %91 = arith.addf %89, %90 : vector<1x128xf32>
    %92 = math.rsqrt %91 : vector<1x128xf32>
    %93 = arith.mulf %75, %92 : vector<1x128xf32>
    %94 = vector.broadcast %93 : vector<1x128xf32> to vector<32x128xf32>
    %95 = arith.mulf %83, %94 : vector<32x128xf32>
    %96 = vector.broadcast %76 : vector<1x128xf32> to vector<32x128xf32>
    %97 = arith.addf %95, %96 : vector<32x128xf32>
    %c0_71 = arith.constant 0 : index
    %c0_72 = arith.constant 0 : index
    %98 = vector.load %arg10[%c0_71, %c0_72] : memref<64x128xbf16, #tpu.memory_space<vmem>>, vector<64x128xbf16>
    %cst_73 = arith.constant dense<0.000000e+00> : vector<32x128xf32>
    %99 = tpu.matmul %13, %98, %cst_73 {dimension_numbers = #tpu.dot_dimension_numbers<[1], [0], [0], [1], [0, 0, 1, 1], [], []>} : vector<32x64xbf16>, vector<64x128xbf16>, vector<32x128xf32> -> vector<32x128xf32>
    %c0_74 = arith.constant 0 : index
    %c0_75 = arith.constant 0 : index
    %100 = vector.load %arg11[%c0_74, %c0_75] : memref<1x128xf32, #tpu.memory_space<vmem>>, vector<1x128xf32>
    %c0_76 = arith.constant 0 : index
    %c0_77 = arith.constant 0 : index
    %101 = vector.load %arg12[%c0_76, %c0_77] : memref<1x128xf32, #tpu.memory_space<vmem>>, vector<1x128xf32>
    %cst_78 = arith.constant dense<0.000000e+00> : vector<32x128xf32>
    %102 = tpu.matmul %99, %2, %cst_78 {dimension_numbers = #tpu.dot_dimension_numbers<[1], [0], [0], [1], [0, 0, 1, 1], [], []>} : vector<32x128xf32>, vector<128x128xf32>, vector<32x128xf32> -> vector<32x128xf32>
    %cst_79 = arith.constant dense<0.000000e+00> : vector<128xf32>
    %103 = vector.multi_reduction <add>, %102, %cst_79 [0] : vector<32x128xf32> to vector<128xf32>
    %104 = vector.shape_cast %103 : vector<128xf32> to vector<1x128xf32>
    %cst_80 = arith.constant 0.001953125 : f32
    %105 = vector.broadcast %cst_80 : f32 to vector<1x128xf32>
    %106 = arith.mulf %104, %105 : vector<1x128xf32>
    %107 = vector.broadcast %106 : vector<1x128xf32> to vector<32x128xf32>
    %108 = arith.subf %99, %107 : vector<32x128xf32>
    %109 = arith.mulf %108, %108 : vector<32x128xf32>
    %cst_81 = arith.constant dense<0.000000e+00> : vector<32x128xf32>
    %110 = tpu.matmul %109, %2, %cst_81 {dimension_numbers = #tpu.dot_dimension_numbers<[1], [0], [0], [1], [0, 0, 1, 1], [], []>} : vector<32x128xf32>, vector<128x128xf32>, vector<32x128xf32> -> vector<32x128xf32>
    %cst_82 = arith.constant dense<0.000000e+00> : vector<128xf32>
    %111 = vector.multi_reduction <add>, %110, %cst_82 [0] : vector<32x128xf32> to vector<128xf32>
    %112 = vector.shape_cast %111 : vector<128xf32> to vector<1x128xf32>
    %cst_83 = arith.constant 0.001953125 : f32
    %113 = vector.broadcast %cst_83 : f32 to vector<1x128xf32>
    %114 = arith.mulf %112, %113 : vector<1x128xf32>
    %cst_84 = arith.constant 9.99999974E-6 : f32
    %115 = vector.broadcast %cst_84 : f32 to vector<1x128xf32>
    %116 = arith.addf %114, %115 : vector<1x128xf32>
    %117 = math.rsqrt %116 : vector<1x128xf32>
    %118 = arith.mulf %100, %117 : vector<1x128xf32>
    %119 = vector.broadcast %118 : vector<1x128xf32> to vector<32x128xf32>
    %120 = arith.mulf %108, %119 : vector<32x128xf32>
    %121 = vector.broadcast %101 : vector<1x128xf32> to vector<32x128xf32>
    %122 = arith.addf %120, %121 : vector<32x128xf32>
    %123 = arith.addf %97, %122 : vector<32x128xf32>
    %cst_85 = arith.constant 0.000000e+00 : f32
    %124 = vector.broadcast %cst_85 : f32 to vector<32x128xf32>
    %125 = arith.maximumf %123, %124 : vector<32x128xf32>
    %c0_86 = arith.constant 0 : index
    %c0_87 = arith.constant 0 : index
    %126 = vector.load %arg13[%c0_86, %c0_87] : memref<32x128xf32, #tpu.memory_space<vmem>>, vector<32x128xf32>
    tpu.vector_store %arg13[%c0_86, %c0_87], %125 {strides = array<i32>} : memref<32x128xf32, #tpu.memory_space<vmem>>, vector<32x128xf32>,
    return
  }
}

</mosaic_0001>

<llo_original>
// kernel: _basic_block_impl.1
$region0: #{_basic_block_impl.1}
  #allocation0 [shape = 'u32[]', space=smem, size = 0x4, offset = 0x4, fixed_abs, tag = 'smem constant byte address 0x4 - core index']
  #allocation1 [shape = 'u32[72,128]{1,0:T(1,128)}', space=vmem, size = 0x9000, scoped, tag = 'internal scratch']
  %s0 = inlined_call_operand.vmem [shape: f32[32,64], index: 0, kind: input, shape index: {}]
  %s1 = inlined_call_operand.vmem [shape: bf16[3,32,32], index: 1, kind: input, shape index: {}, may-alias: {1,5}]
  %s2 = inlined_call_operand.vmem [shape: bf16[3,64,128], index: 2, kind: input, shape index: {}]
  %s3 = inlined_call_operand.vmem [shape: f32[1,128], index: 3, kind: input, shape index: {}]
  %s4 = inlined_call_operand.vmem [shape: f32[1,128], index: 4, kind: input, shape index: {}]
  %s5 = inlined_call_operand.vmem [shape: bf16[3,32,32], index: 5, kind: input, shape index: {}, may-alias: {1,5}]
  %s6 = inlined_call_operand.vmem [shape: bf16[3,128,128], index: 6, kind: input, shape index: {}]
  %s7 = inlined_call_operand.vmem [shape: f32[1,128], index: 7, kind: input, shape index: {}]
  %s8 = inlined_call_operand.vmem [shape: f32[1,128], index: 8, kind: input, shape index: {}]
  %s9 = inlined_call_operand.vmem [shape: f32[128,128], index: 9, kind: input, shape index: {}]
  %s10 = inlined_call_operand.vmem [shape: bf16[64,128], index: 10, kind: input, shape index: {}]
  %s11 = inlined_call_operand.vmem [shape: f32[1,128], index: 11, kind: input, shape index: {}]
  %s12 = inlined_call_operand.vmem [shape: f32[1,128], index: 12, kind: input, shape index: {}]
  %s13 = inlined_call_operand.vmem [shape: f32[32,128], index: 13, kind: output, shape index: {}]
  %s14 = sld [smem:[#allocation0]]
  $region62: #{_basic_block_impl.1} parent=0
    _
  %s16 = ssub.s32 1, %s14
  %s17 = scalar_select 0, %s16, %s14
  // Predicated region
  $region2: #{_basic_block_impl.1} parent=0 // pred_check
    _
  $region3: #{_basic_block_impl.1} parent=0 // pred_check_branch
    %19 = sbr.rel (0) target = $region5
  $region4: #{_basic_block_impl.1} parent=0 // pred_region
    _
  $region5: #{_basic_block_impl.1} parent=0 // pred_fallthru
    _
  // Predicated region
  $region6: #{_basic_block_impl.1} parent=0 // pred_check
    _
  $region7: #{_basic_block_impl.1} parent=0 // pred_check_branch
    %21 = sbr.rel (0) target = $region9
  $region8: #{_basic_block_impl.1} parent=0 // pred_region
    _
  $region9: #{_basic_block_impl.1} parent=0 // pred_fallthru
    _
  // Predicated region
  $region10: #{_basic_block_impl.1} parent=0 // pred_check
    _
  $region11: #{_basic_block_impl.1} parent=0 // pred_check_branch
    %23 = sbr.rel (0) target = $region13
  $region12: #{_basic_block_impl.1} parent=0 // pred_region
    _
  $region13: #{_basic_block_impl.1} parent=0 // pred_fallthru
    _
  // Predicated region
  $region14: #{_basic_block_impl.1} parent=0 // pred_check
    _
  $region15: #{_basic_block_impl.1} parent=0 // pred_check_branch
    %25 = sbr.rel (0) target = $region17
  $region16: #{_basic_block_impl.1} parent=0 // pred_region
    _
  $region17: #{_basic_block_impl.1} parent=0 // pred_fallthru
    _
  // Predicated region
  $region18: #{_basic_block_impl.1} parent=0 // pred_check
    _
  $region19: #{_basic_block_impl.1} parent=0 // pred_check_branch
    %27 = sbr.rel (0) target = $region21
  $region20: #{_basic_block_impl.1} parent=0 // pred_region
    _
  $region21: #{_basic_block_impl.1} parent=0 // pred_fallthru
    _
  // Predicated region
  $region22: #{_basic_block_impl.1} parent=0 // pred_check
    _
  $region23: #{_basic_block_impl.1} parent=0 // pred_check_branch
    %29 = sbr.rel (0) target = $region25
  $region24: #{_basic_block_impl.1} parent=0 // pred_region
    _
  $region25: #{_basic_block_impl.1} parent=0 // pred_fallthru
    _
  // Predicated region
  $region26: #{_basic_block_impl.1} parent=0 // pred_check
    _
  $region27: #{_basic_block_impl.1} parent=0 // pred_check_branch
    %31 = sbr.rel (0) target = $region29
  $region28: #{_basic_block_impl.1} parent=0 // pred_region
    _
  $region29: #{_basic_block_impl.1} parent=0 // pred_fallthru
    _
  // Predicated region
  $region30: #{_basic_block_impl.1} parent=0 // pred_check
    _
  $region31: #{_basic_block_impl.1} parent=0 // pred_check_branch
    %33 = sbr.rel (0) target = $region33
  $region32: #{_basic_block_impl.1} parent=0 // pred_region
    _
  $region33: #{_basic_block_impl.1} parent=0 // pred_fallthru
    _
  // Predicated region
  $region34: #{_basic_block_impl.1} parent=0 // pred_check
    _
  $region35: #{_basic_block_impl.1} parent=0 // pred_check_branch
    %35 = sbr.rel (0) target = $region37
  $region36: #{_basic_block_impl.1} parent=0 // pred_region
    _
  $region37: #{_basic_block_impl.1} parent=0 // pred_fallthru
    _
  // Predicated region
  $region38: #{_basic_block_impl.1} parent=0 // pred_check
    _
  $region39: #{_basic_block_impl.1} parent=0 // pred_check_branch
    %37 = sbr.rel (0) target = $region41
  $region40: #{_basic_block_impl.1} parent=0 // pred_region
    _
  $region41: #{_basic_block_impl.1} parent=0 // pred_fallthru
    _
  // Predicated region
  $region42: #{_basic_block_impl.1} parent=0 // pred_check
    _
  $region43: #{_basic_block_impl.1} parent=0 // pred_check_branch
    %39 = sbr.rel (0) target = $region45
  $region44: #{_basic_block_impl.1} parent=0 // pred_region
    _
  $region45: #{_basic_block_impl.1} parent=0 // pred_fallthru
    _
  // Predicated region
  $region46: #{_basic_block_impl.1} parent=0 // pred_check
    _
  $region47: #{_basic_block_impl.1} parent=0 // pred_check_branch
    %41 = sbr.rel (0) target = $region49
  $region48: #{_basic_block_impl.1} parent=0 // pred_region
    _
  $region49: #{_basic_block_impl.1} parent=0 // pred_fallthru
    _
  // Predicated region
  $region50: #{_basic_block_impl.1} parent=0 // pred_check
    _
  $region51: #{_basic_block_impl.1} parent=0 // pred_check_branch
    %43 = sbr.rel (0) target = $region53
  $region52: #{_basic_block_impl.1} parent=0 // pred_region
    _
  $region53: #{_basic_block_impl.1} parent=0 // pred_fallthru
    _
  %v45 = vld [vmem:[%s0] sm:$0xff]
  %v46 = vld [vmem:[%s0 + $0x8] sm:$0xff]
  %v47 = vld [vmem:[%s0 + $0x10] sm:$0xff]
  %v48 = vld [vmem:[%s0 + $0x18] sm:$0xff]
  %v49 = vpack.c.bf16 %v46, %v45
  %v50 = vpack.c.bf16 %v48, %v47
  %v51 = vld [vmem:[%s9] sm:$0xff]
  %v52 = vld [vmem:[%s9 + $0x8] sm:$0xff]
  %v53 = vld [vmem:[%s9 + $0x10] sm:$0xff]
  %v54 = vld [vmem:[%s9 + $0x18] sm:$0xff]
  %v55 = vld [vmem:[%s9 + $0x20] sm:$0xff]
  %v56 = vld [vmem:[%s9 + $0x28] sm:$0xff]
  %v57 = vld [vmem:[%s9 + $0x30] sm:$0xff]
  %v58 = vld [vmem:[%s9 + $0x38] sm:$0xff]
  %v59 = vld [vmem:[%s9 + $0x40] sm:$0xff]
  %v60 = vld [vmem:[%s9 + $0x48] sm:$0xff]
  %v61 = vld [vmem:[%s9 + $0x50] sm:$0xff]
  %v62 = vld [vmem:[%s9 + $0x58] sm:$0xff]
  %v63 = vld [vmem:[%s9 + $0x60] sm:$0xff]
  %v64 = vld [vmem:[%s9 + $0x68] sm:$0xff]
  %v65 = vld [vmem:[%s9 + $0x70] sm:$0xff]
  %v66 = vld [vmem:[%s9 + $0x78] sm:$0xff]
  %v67 = vld [vmem:[%s1] sm:$0xf]
  %v68 = vld [vmem:[%s1 + $0x4] sm:$0xf]
  %v69 = vld [vmem:[%s1 + $0x8] sm:$0xf]
  %v70 = vld [vmem:[%s1 + $0xc] sm:$0xf]
  %v75 = vunpack.c.l.b16 %v67
  %v76 = vunpack.c.l.b16 %v68
  %v77 = vunpack.c.l.b16 %v69
  %v78 = vunpack.c.l.b16 %v70
  %v79 = vpack.c.b16 %v76, %v75
  %v80 = vpack.c.b16 %v78, %v77
  %vm81 = vcmask 261120
  %v83 = vsel %vm81, %v79, 0
  %v86 = vsel %vm81, %v80, 0
  %88 = vmatpush.bf16.msra.mxu0 0
  %89 = vmatpush.bf16.msra.mxu0 0
  %90 = vmatpush.bf16.msra.mxu0 0
  %91 = vmatpush.bf16.msra.mxu0 0
  %92 = vmatpush.bf16.msra.mxu0 0
  %93 = vmatpush.bf16.msra.mxu0 0
  %94 = vmatpush.bf16.msra.mxu0 %v50
  %95 = vmatpush.bf16.msra.mxu0 %v49
  %96 = vmatmul.bf16.gmra.mxu0 %v83
  %v97 = vpop.f32.mrf.mxu0
  %v98 = vadd.f32 0.0, %v97
  %v99 = vpop.f32.mrf.mxu0
  %v100 = vadd.f32 0.0, %v99
  %101 = vmatmul.bf16.gmra.mxu0 %v86
  %v102 = vpop.f32.mrf.mxu0
  %v103 = vadd.f32 0.0, %v102
  %v104 = vpop.f32.mrf.mxu0
  %v105 = vadd.f32 0.0, %v104
  %106 = vdwg.mxu0
  %v107 = vpack.c.bf16 %v100, %v98
  %v108 = vpack.c.bf16 %v105, %v103
  %v109 = vld [vmem:[%s2] sm:$0xf]
  %v110 = vld [vmem:[%s2 + $0x4] sm:$0xf]
  %v111 = vld [vmem:[%s2 + $0x8] sm:$0xf]
  %v112 = vld [vmem:[%s2 + $0xc] sm:$0xf]
  %v113 = vld [vmem:[%s2 + $0x10] sm:$0xf]
  %v114 = vld [vmem:[%s2 + $0x14] sm:$0xf]
  %v115 = vld [vmem:[%s2 + $0x18] sm:$0xf]
  %v116 = vld [vmem:[%s2 + $0x1c] sm:$0xf]
  %s117 = scalar_lea.vmem %s1, 16
  %v118 = vld [vmem:[%s117] sm:$0xf]
  %v119 = vld [vmem:[%s117 + $0x4] sm:$0xf]
  %v120 = vld [vmem:[%s117 + $0x8] sm:$0xf]
  %v121 = vld [vmem:[%s117 + $0xc] sm:$0xf]
  %v126 = vunpack.c.l.b16 %v118
  %v127 = vunpack.c.l.b16 %v119
  %v128 = vunpack.c.l.b16 %v120
  %v129 = vunpack.c.l.b16 %v121
  %v130 = vpack.c.b16 %v127, %v126
  %v131 = vpack.c.b16 %v129, %v128
  %v133 = vsel %vm81, %v130, 0
  %v136 = vsel %vm81, %v131, 0
  %138 = vmatpush.bf16.msra.mxu0 0
  %139 = vmatpush.bf16.msra.mxu0 0
  %140 = vmatpush.bf16.msra.mxu0 0
  %141 = vmatpush.bf16.msra.mxu0 0
  %142 = vmatpush.bf16.msra.mxu0 0
  %143 = vmatpush.bf16.msra.mxu0 0
  %144 = vmatpush.bf16.msra.mxu0 %v50
  %145 = vmatpush.bf16.msra.mxu0 %v49
  %146 = vmatmul.bf16.gmra.mxu0 %v133
  %v147 = vpop.f32.mrf.mxu0
  %v148 = vadd.f32 0.0, %v147
  %v149 = vpop.f32.mrf.mxu0
  %v150 = vadd.f32 0.0, %v149
  %151 = vmatmul.bf16.gmra.mxu0 %v136
  %v152 = vpop.f32.mrf.mxu0
  %v153 = vadd.f32 0.0, %v152
  %v154 = vpop.f32.mrf.mxu0
  %v155 = vadd.f32 0.0, %v154
  %156 = vdwg.mxu0
  %v157 = vpack.c.bf16 %v150, %v148
  %v158 = vpack.c.bf16 %v155, %v153
  %s159 = scalar_lea.vmem %s2, 32
  %v160 = vld [vmem:[%s159] sm:$0xf]
  %v161 = vld [vmem:[%s159 + $0x4] sm:$0xf]
  %v162 = vld [vmem:[%s159 + $0x8] sm:$0xf]
  %v163 = vld [vmem:[%s159 + $0xc] sm:$0xf]
  %v164 = vld [vmem:[%s159 + $0x10] sm:$0xf]
  %v165 = vld [vmem:[%s159 + $0x14] sm:$0xf]
  %v166 = vld [vmem:[%s159 + $0x18] sm:$0xf]
  %v167 = vld [vmem:[%s159 + $0x1c] sm:$0xf]
  %v176 = vunpack.c.l.b16 %v160
  %v177 = vunpack.c.l.b16 %v161
  %v178 = vunpack.c.l.b16 %v162
  %v179 = vunpack.c.l.b16 %v163
  %v180 = vunpack.c.l.b16 %v164
  %v181 = vunpack.c.l.b16 %v165
  %v182 = vunpack.c.l.b16 %v166
  %v183 = vunpack.c.l.b16 %v167
  %v184 = vpack.c.b16 %v177, %v176
  %v185 = vpack.c.b16 %v179, %v178
  %v186 = vpack.c.b16 %v181, %v180
  %v187 = vpack.c.b16 %v183, %v182
  %vm192 = vcmask 523264
  %v194 = vsel %vm192, %v157, 0
  %v197 = vsel %vm192, %v158, 0
  %199 = vmatpush.bf16.msra.mxu0 0
  %200 = vmatpush.bf16.msra.mxu0 0
  %201 = vmatpush.bf16.msra.mxu0 0
  %202 = vmatpush.bf16.msra.mxu0 0
  %203 = vmatpush.bf16.msra.mxu0 %v187
  %204 = vmatpush.bf16.msra.mxu0 %v186
  %205 = vmatpush.bf16.msra.mxu0 %v185
  %206 = vmatpush.bf16.msra.mxu0 %v184
  %207 = vmatmul.bf16.gmra.mxu0 %v194
  %v208 = vpop.f32.mrf.mxu0
  %v209 = vadd.f32 0.0, %v208
  %v210 = vpop.f32.mrf.mxu0
  %v211 = vadd.f32 0.0, %v210
  %212 = vmatmul.bf16.gmra.mxu0 %v197
  %v213 = vpop.f32.mrf.mxu0
  %v214 = vadd.f32 0.0, %v213
  %v215 = vpop.f32.mrf.mxu0
  %v216 = vadd.f32 0.0, %v215
  %217 = vdwg.mxu0
  %v226 = vunpack.c.l.b16 %v109
  %v227 = vunpack.c.l.b16 %v110
  %v228 = vunpack.c.l.b16 %v111
  %v229 = vunpack.c.l.b16 %v112
  %v230 = vunpack.c.l.b16 %v113
  %v231 = vunpack.c.l.b16 %v114
  %v232 = vunpack.c.l.b16 %v115
  %v233 = vunpack.c.l.b16 %v116
  %v234 = vpack.c.b16 %v227, %v226
  %v235 = vpack.c.b16 %v229, %v228
  %v236 = vpack.c.b16 %v231, %v230
  %v237 = vpack.c.b16 %v233, %v232
  %v243 = vsel %vm192, %v107, 0
  %v246 = vsel %vm192, %v108, 0
  %248 = vmatpush.bf16.msra.mxu0 0
  %249 = vmatpush.bf16.msra.mxu0 0
  %250 = vmatpush.bf16.msra.mxu0 0
  %251 = vmatpush.bf16.msra.mxu0 0
  %252 = vmatpush.bf16.msra.mxu0 %v237
  %253 = vmatpush.bf16.msra.mxu0 %v236
  %254 = vmatpush.bf16.msra.mxu0 %v235
  %255 = vmatpush.bf16.msra.mxu0 %v234
  %256 = vmatmul.bf16.gmra.mxu0 %v243
  %v257 = vpop.f32.mrf.mxu0
  %v258 = vadd.f32 %v209, %v257
  %v259 = vpop.f32.mrf.mxu0
  %v260 = vadd.f32 %v211, %v259
  %261 = vmatmul.bf16.gmra.mxu0 %v246
  %v262 = vpop.f32.mrf.mxu0
  %v263 = vadd.f32 %v214, %v262
  %v264 = vpop.f32.mrf.mxu0
  %v265 = vadd.f32 %v216, %v264
  %266 = vdwg.mxu0
  %s267 = scalar_lea.vmem %s1, 32
  %v268 = vld [vmem:[%s267] sm:$0xf]
  %v269 = vld [vmem:[%s267 + $0x4] sm:$0xf]
  %v270 = vld [vmem:[%s267 + $0x8] sm:$0xf]
  %v271 = vld [vmem:[%s267 + $0xc] sm:$0xf]
  %v276 = vunpack.c.l.b16 %v268
  %v277 = vunpack.c.l.b16 %v269
  %v278 = vunpack.c.l.b16 %v270
  %v279 = vunpack.c.l.b16 %v271
  %v280 = vpack.c.b16 %v277, %v276
  %v281 = vpack.c.b16 %v279, %v278
  %v283 = vsel %vm81, %v280, 0
  %v286 = vsel %vm81, %v281, 0
  %288 = vmatpush.bf16.msra.mxu0 0
  %289 = vmatpush.bf16.msra.mxu0 0
  %290 = vmatpush.bf16.msra.mxu0 0
  %291 = vmatpush.bf16.msra.mxu0 0
  %292 = vmatpush.bf16.msra.mxu0 0
  %293 = vmatpush.bf16.msra.mxu0 0
  %294 = vmatpush.bf16.msra.mxu0 %v50
  %295 = vmatpush.bf16.msra.mxu0 %v49
  %296 = vmatmul.bf16.gmra.mxu0 %v283
  %v297 = vpop.f32.mrf.mxu0
  %v298 = vadd.f32 0.0, %v297
  %v299 = vpop.f32.mrf.mxu0
  %v300 = vadd.f32 0.0, %v299
  %301 = vmatmul.bf16.gmra.mxu0 %v286
  %v302 = vpop.f32.mrf.mxu0
  %v303 = vadd.f32 0.0, %v302
  %v304 = vpop.f32.mrf.mxu0
  %v305 = vadd.f32 0.0, %v304
  %306 = vdwg.mxu0
  %v307 = vpack.c.bf16 %v300, %v298
  %v308 = vpack.c.bf16 %v305, %v303
  %s309 = scalar_lea.vmem %s2, 64
  %v310 = vld [vmem:[%s309] sm:$0xf]
  %v311 = vld [vmem:[%s309 + $0x4] sm:$0xf]
  %v312 = vld [vmem:[%s309 + $0x8] sm:$0xf]
  %v313 = vld [vmem:[%s309 + $0xc] sm:$0xf]
  %v314 = vld [vmem:[%s309 + $0x10] sm:$0xf]
  %v315 = vld [vmem:[%s309 + $0x14] sm:$0xf]
  %v316 = vld [vmem:[%s309 + $0x18] sm:$0xf]
  %v317 = vld [vmem:[%s309 + $0x1c] sm:$0xf]
  %v326 = vunpack.c.l.b16 %v310
  %v327 = vunpack.c.l.b16 %v311
  %v328 = vunpack.c.l.b16 %v312
  %v329 = vunpack.c.l.b16 %v313
  %v330 = vunpack.c.l.b16 %v314
  %v331 = vunpack.c.l.b16 %v315
  %v332 = vunpack.c.l.b16 %v316
  %v333 = vunpack.c.l.b16 %v317
  %v334 = vpack.c.b16 %v327, %v326
  %v335 = vpack.c.b16 %v329, %v328
  %v336 = vpack.c.b16 %v331, %v330
  %v337 = vpack.c.b16 %v333, %v332
  %v343 = vsel %vm192, %v307, 0
  %v346 = vsel %vm192, %v308, 0
  %348 = vmatpush.bf16.msra.mxu0 0
  %349 = vmatpush.bf16.msra.mxu0 0
  %350 = vmatpush.bf16.msra.mxu0 0
  %351 = vmatpush.bf16.msra.mxu0 0
  %352 = vmatpush.bf16.msra.mxu0 %v337
  %353 = vmatpush.bf16.msra.mxu0 %v336
  %354 = vmatpush.bf16.msra.mxu0 %v335
  %355 = vmatpush.bf16.msra.mxu0 %v334
  %356 = vmatmul.bf16.gmra.mxu0 %v343
  %v357 = vpop.f32.mrf.mxu0
  %v358 = vadd.f32 0.0, %v357
  %v359 = vpop.f32.mrf.mxu0
  %v360 = vadd.f32 0.0, %v359
  %361 = vmatmul.bf16.gmra.mxu0 %v346
  %v362 = vpop.f32.mrf.mxu0
  %v363 = vadd.f32 0.0, %v362
  %v364 = vpop.f32.mrf.mxu0
  %v365 = vadd.f32 0.0, %v364
  %366 = vdwg.mxu0
  %v367 = vadd.f32 %v258, %v358
  %v368 = vadd.f32 %v260, %v360
  %v369 = vadd.f32 %v263, %v363
  %v370 = vadd.f32 %v265, %v365
  %v371 = vld [vmem:[%s3] sm:$0x1]
  %v372 = vld [vmem:[%s4] sm:$0x1]
  %373 = vmatpush.msra.mxu0 %v66
  %374 = vmatpush.msra.mxu0 %v65
  %375 = vmatpush.msra.mxu0 %v64
  %376 = vmatpush.msra.mxu0 %v63
  %377 = vmatpush.msra.mxu0 %v62
  %378 = vmatpush.msra.mxu0 %v61
  %379 = vmatpush.msra.mxu0 %v60
  %380 = vmatpush.msra.mxu0 %v59
  %381 = vmatpush.msra.mxu0 %v58
  %382 = vmatpush.msra.mxu0 %v57
  %383 = vmatpush.msra.mxu0 %v56
  %384 = vmatpush.msra.mxu0 %v55
  %385 = vmatpush.msra.mxu0 %v54
  %386 = vmatpush.msra.mxu0 %v53
  %387 = vmatpush.msra.mxu0 %v52
  %388 = vmatpush.msra.mxu0 %v51
  %389 = vmatmul.f32.gmra.mxu0 %v367
  %v390 = vpop.f32.mrf.mxu0
  %v391 = vadd.f32 0.0, %v390
  %392 = vmatmul.f32.gmra.mxu0 %v368
  %v393 = vpop.f32.mrf.mxu0
  %v394 = vadd.f32 0.0, %v393
  %395 = vmatmul.f32.gmra.mxu0 %v369
  %v396 = vpop.f32.mrf.mxu0
  %v397 = vadd.f32 0.0, %v396
  %398 = vmatmul.f32.gmra.mxu0 %v370
  %v399 = vpop.f32.mrf.mxu0
  %v400 = vadd.f32 0.0, %v399
  %401 = vdwg.mxu0
  %v402 = vadd.f32 %v391, %v394
  %v403 = vadd.f32 %v402, %v397
  %v404 = vadd.f32 %v403, %v400
  %v405 = vrot.slane %v404, 4
  %v406 = vadd.f32 %v404, %v405
  %v407 = vrot.slane %v406, 2
  %v408 = vadd.f32 %v406, %v407
  %v409 = vrot.slane %v408, 1
  %v410 = vadd.f32 %v408, %v409
  %v411 = vmul.f32 %v410, 0.001953125
  %v412 = vsub.f32 %v367, %v411
  %v413 = vsub.f32 %v368, %v411
  %v414 = vsub.f32 %v369, %v411
  %v415 = vsub.f32 %v370, %v411
  %v416 = vmul.f32 %v412, %v412
  %v417 = vmul.f32 %v413, %v413
  %v418 = vmul.f32 %v414, %v414
  %v419 = vmul.f32 %v415, %v415
  %420 = vmatpush.msra.mxu0 %v66
  %421 = vmatpush.msra.mxu0 %v65
  %422 = vmatpush.msra.mxu0 %v64
  %423 = vmatpush.msra.mxu0 %v63
  %424 = vmatpush.msra.mxu0 %v62
  %425 = vmatpush.msra.mxu0 %v61
  %426 = vmatpush.msra.mxu0 %v60
  %427 = vmatpush.msra.mxu0 %v59
  %428 = vmatpush.msra.mxu0 %v58
  %429 = vmatpush.msra.mxu0 %v57
  %430 = vmatpush.msra.mxu0 %v56
  %431 = vmatpush.msra.mxu0 %v55
  %432 = vmatpush.msra.mxu0 %v54
  %433 = vmatpush.msra.mxu0 %v53
  %434 = vmatpush.msra.mxu0 %v52
  %435 = vmatpush.msra.mxu0 %v51
  %436 = vmatmul.f32.gmra.mxu0 %v416
  %v437 = vpop.f32.mrf.mxu0
  %v438 = vadd.f32 0.0, %v437
  %439 = vmatmul.f32.gmra.mxu0 %v417
  %v440 = vpop.f32.mrf.mxu0
  %v441 = vadd.f32 0.0, %v440
  %442 = vmatmul.f32.gmra.mxu0 %v418
  %v443 = vpop.f32.mrf.mxu0
  %v444 = vadd.f32 0.0, %v443
  %445 = vmatmul.f32.gmra.mxu0 %v419
  %v446 = vpop.f32.mrf.mxu0
  %v447 = vadd.f32 0.0, %v446
  %448 = vdwg.mxu0
  %v449 = vadd.f32 %v438, %v441
  %v450 = vadd.f32 %v449, %v444
  %v451 = vadd.f32 %v450, %v447
  %v452 = vrot.slane %v451, 4
  %v453 = vadd.f32 %v451, %v452
  %v454 = vrot.slane %v453, 2
  %v455 = vadd.f32 %v453, %v454
  %v456 = vrot.slane %v455, 1
  %v457 = vadd.f32 %v455, %v456
  %v458 = vmul.f32 %v457, 0.001953125
  %v459 = vadd.f32 %v458, 1e-05
  %v460 = vrsqrt.pop %v459
  %v461 = vmul.f32 %v460, %v459
  %v462 = vmul.f32 %v461, %v460
  %v463 = vmul.f32 0.5, %v462
  %v464 = vsub.f32 1.5, %v463
  %v465 = vmul.f32 %v460, %v464
  %vm466 = vweird.f32 %v459
  %vm467 = vweird.f32 %v460
  %vm468 = vmor %vm466, %vm467
  %v469 = vsel %vm468, %v460, %v465
  %v470 = vmul.f32 %v371, %v469
  %v472 = vperm.slane %v470, 0
  %v474 = vmul.f32 %v412, %v472
  %v475 = vmul.f32 %v413, %v472
  %v476 = vmul.f32 %v414, %v472
  %v477 = vmul.f32 %v415, %v472
  %v479 = vperm.slane %v372, 0
  %v481 = vadd.f32 %v474, %v479
  %v482 = vadd.f32 %v475, %v479
  %v483 = vadd.f32 %v476, %v479
  %v484 = vadd.f32 %v477, %v479
  %v485 = vmax.f32 %v481, 0.0
  %v486 = vmax.f32 %v482, 0.0
  %v487 = vmax.f32 %v483, 0.0
  %v488 = vmax.f32 %v484, 0.0
  %v489 = vpack.c.bf16 %v486, %v485
  %v490 = vpack.c.bf16 %v488, %v487
  %v491 = vld [vmem:[%s5] sm:$0xf]
  %v492 = vld [vmem:[%s5 + $0x4] sm:$0xf]
  %v493 = vld [vmem:[%s5 + $0x8] sm:$0xf]
  %v494 = vld [vmem:[%s5 + $0xc] sm:$0xf]
  %v499 = vunpack.c.l.b16 %v491
  %v500 = vunpack.c.l.b16 %v492
  %v501 = vunpack.c.l.b16 %v493
  %v502 = vunpack.c.l.b16 %v494
  %v503 = vpack.c.b16 %v500, %v499
  %v504 = vpack.c.b16 %v502, %v501
  %v506 = vsel %vm81, %v503, 0
  %v509 = vsel %vm81, %v504, 0
  %511 = vmatpush.bf16.msra.mxu0 0
  %512 = vmatpush.bf16.msra.mxu0 0
  %513 = vmatpush.bf16.msra.mxu0 0
  %514 = vmatpush.bf16.msra.mxu0 0
  %515 = vmatpush.bf16.msra.mxu0 0
  %516 = vmatpush.bf16.msra.mxu0 0
  %517 = vmatpush.bf16.msra.mxu0 %v490
  %518 = vmatpush.bf16.msra.mxu0 %v489
  %519 = vmatmul.bf16.gmra.mxu0 %v506
  %v520 = vpop.f32.mrf.mxu0
  %v521 = vadd.f32 0.0, %v520
  %v522 = vpop.f32.mrf.mxu0
  %v523 = vadd.f32 0.0, %v522
  %524 = vmatmul.bf16.gmra.mxu0 %v509
  %v525 = vpop.f32.mrf.mxu0
  %v526 = vadd.f32 0.0, %v525
  %v527 = vpop.f32.mrf.mxu0
  %v528 = vadd.f32 0.0, %v527
  %529 = vdwg.mxu0
  %v530 = vpack.c.bf16 %v523, %v521
  %v531 = vpack.c.bf16 %v528, %v526
  %v532 = vld [vmem:[%s6] sm:$0xf]
  %v533 = vld [vmem:[%s6 + $0x4] sm:$0xf]
  %v534 = vld [vmem:[%s6 + $0x8] sm:$0xf]
  %v535 = vld [vmem:[%s6 + $0xc] sm:$0xf]
  %v536 = vld [vmem:[%s6 + $0x10] sm:$0xf]
  %v537 = vld [vmem:[%s6 + $0x14] sm:$0xf]
  %v538 = vld [vmem:[%s6 + $0x18] sm:$0xf]
  %v539 = vld [vmem:[%s6 + $0x1c] sm:$0xf]
  %v540 = vld [vmem:[%s6 + $0x20] sm:$0xf]
  %v541 = vld [vmem:[%s6 + $0x24] sm:$0xf]
  %v542 = vld [vmem:[%s6 + $0x28] sm:$0xf]
  %v543 = vld [vmem:[%s6 + $0x2c] sm:$0xf]
  %v544 = vld [vmem:[%s6 + $0x30] sm:$0xf]
  %v545 = vld [vmem:[%s6 + $0x34] sm:$0xf]
  %v546 = vld [vmem:[%s6 + $0x38] sm:$0xf]
  %v547 = vld [vmem:[%s6 + $0x3c] sm:$0xf]
  %s548 = scalar_lea.vmem %s5, 16
  %v549 = vld [vmem:[%s548] sm:$0xf]
  %v550 = vld [vmem:[%s548 + $0x4] sm:$0xf]
  %v551 = vld [vmem:[%s548 + $0x8] sm:$0xf]
  %v552 = vld [vmem:[%s548 + $0xc] sm:$0xf]
  %v557 = vunpack.c.l.b16 %v549
  %v558 = vunpack.c.l.b16 %v550
  %v559 = vunpack.c.l.b16 %v551
  %v560 = vunpack.c.l.b16 %v552
  %v561 = vpack.c.b16 %v558, %v557
  %v562 = vpack.c.b16 %v560, %v559
  %v564 = vsel %vm81, %v561, 0
  %v567 = vsel %vm81, %v562, 0
  %569 = vmatpush.bf16.msra.mxu0 0
  %570 = vmatpush.bf16.msra.mxu0 0
  %571 = vmatpush.bf16.msra.mxu0 0
  %572 = vmatpush.bf16.msra.mxu0 0
  %573 = vmatpush.bf16.msra.mxu0 0
  %574 = vmatpush.bf16.msra.mxu0 0
  %575 = vmatpush.bf16.msra.mxu0 %v490
  %576 = vmatpush.bf16.msra.mxu0 %v489
  %577 = vmatmul.bf16.gmra.mxu0 %v564
  %v578 = vpop.f32.mrf.mxu0
  %v579 = vadd.f32 0.0, %v578
  %v580 = vpop.f32.mrf.mxu0
  %v581 = vadd.f32 0.0, %v580
  %582 = vmatmul.bf16.gmra.mxu0 %v567
  %v583 = vpop.f32.mrf.mxu0
  %v584 = vadd.f32 0.0, %v583
  %v585 = vpop.f32.mrf.mxu0
  %v586 = vadd.f32 0.0, %v585
  %587 = vdwg.mxu0
  %v588 = vpack.c.bf16 %v581, %v579
  %v589 = vpack.c.bf16 %v586, %v584
  %s590 = scalar_lea.vmem %s6, 64
  %v591 = vld [vmem:[%s590] sm:$0xf]
  %v592 = vld [vmem:[%s590 + $0x4] sm:$0xf]
  %v593 = vld [vmem:[%s590 + $0x8] sm:$0xf]
  %v594 = vld [vmem:[%s590 + $0xc] sm:$0xf]
  %v595 = vld [vmem:[%s590 + $0x10] sm:$0xf]
  %v596 = vld [vmem:[%s590 + $0x14] sm:$0xf]
  %v597 = vld [vmem:[%s590 + $0x18] sm:$0xf]
  %v598 = vld [vmem:[%s590 + $0x1c] sm:$0xf]
  %v599 = vld [vmem:[%s590 + $0x20] sm:$0xf]
  %v600 = vld [vmem:[%s590 + $0x24] sm:$0xf]
  %v601 = vld [vmem:[%s590 + $0x28] sm:$0xf]
  %v602 = vld [vmem:[%s590 + $0x2c] sm:$0xf]
  %v603 = vld [vmem:[%s590 + $0x30] sm:$0xf]
  %v604 = vld [vmem:[%s590 + $0x34] sm:$0xf]
  %v605 = vld [vmem:[%s590 + $0x38] sm:$0xf]
  %v606 = vld [vmem:[%s590 + $0x3c] sm:$0xf]
  %v623 = vunpack.c.l.b16 %v591
  %v624 = vunpack.c.l.b16 %v592
  %v625 = vunpack.c.l.b16 %v593
  %v626 = vunpack.c.l.b16 %v594
  %v627 = vunpack.c.l.b16 %v595
  %v628 = vunpack.c.l.b16 %v596
  %v629 = vunpack.c.l.b16 %v597
  %v630 = vunpack.c.l.b16 %v598
  %v631 = vunpack.c.l.b16 %v599
  %v632 = vunpack.c.l.b16 %v600
  %v633 = vunpack.c.l.b16 %v601
  %v634 = vunpack.c.l.b16 %v602
  %v635 = vunpack.c.l.b16 %v603
  %v636 = vunpack.c.l.b16 %v604
  %v637 = vunpack.c.l.b16 %v605
  %v638 = vunpack.c.l.b16 %v606
  %v639 = vpack.c.b16 %v624, %v623
  %v640 = vpack.c.b16 %v626, %v625
  %v641 = vpack.c.b16 %v628, %v627
  %v642 = vpack.c.b16 %v630, %v629
  %v643 = vpack.c.b16 %v632, %v631
  %v644 = vpack.c.b16 %v634, %v633
  %v645 = vpack.c.b16 %v636, %v635
  %v646 = vpack.c.b16 %v638, %v637
  %655 = vmatpush.bf16.msra.mxu0 %v646
  %656 = vmatpush.bf16.msra.mxu0 %v645
  %657 = vmatpush.bf16.msra.mxu0 %v644
  %658 = vmatpush.bf16.msra.mxu0 %v643
  %659 = vmatpush.bf16.msra.mxu0 %v642
  %660 = vmatpush.bf16.msra.mxu0 %v641
  %661 = vmatpush.bf16.msra.mxu0 %v640
  %662 = vmatpush.bf16.msra.mxu0 %v639
  %663 = vmatmul.bf16.gmra.mxu0 %v588
  %v664 = vpop.f32.mrf.mxu0
  %v665 = vadd.f32 0.0, %v664
  %v666 = vpop.f32.mrf.mxu0
  %v667 = vadd.f32 0.0, %v666
  %668 = vmatmul.bf16.gmra.mxu0 %v589
  %v669 = vpop.f32.mrf.mxu0
  %v670 = vadd.f32 0.0, %v669
  %v671 = vpop.f32.mrf.mxu0
  %v672 = vadd.f32 0.0, %v671
  %673 = vdwg.mxu0
  %v690 = vunpack.c.l.b16 %v532
  %v691 = vunpack.c.l.b16 %v533
  %v692 = vunpack.c.l.b16 %v534
  %v693 = vunpack.c.l.b16 %v535
  %v694 = vunpack.c.l.b16 %v536
  %v695 = vunpack.c.l.b16 %v537
  %v696 = vunpack.c.l.b16 %v538
  %v697 = vunpack.c.l.b16 %v539
  %v698 = vunpack.c.l.b16 %v540
  %v699 = vunpack.c.l.b16 %v541
  %v700 = vunpack.c.l.b16 %v542
  %v701 = vunpack.c.l.b16 %v543
  %v702 = vunpack.c.l.b16 %v544
  %v703 = vunpack.c.l.b16 %v545
  %v704 = vunpack.c.l.b16 %v546
  %v705 = vunpack.c.l.b16 %v547
  %v706 = vpack.c.b16 %v691, %v690
  %v707 = vpack.c.b16 %v693, %v692
  %v708 = vpack.c.b16 %v695, %v694
  %v709 = vpack.c.b16 %v697, %v696
  %v710 = vpack.c.b16 %v699, %v698
  %v711 = vpack.c.b16 %v701, %v700
  %v712 = vpack.c.b16 %v703, %v702
  %v713 = vpack.c.b16 %v705, %v704
  %722 = vmatpush.bf16.msra.mxu0 %v713
  %723 = vmatpush.bf16.msra.mxu0 %v712
  %724 = vmatpush.bf16.msra.mxu0 %v711
  %725 = vmatpush.bf16.msra.mxu0 %v710
  %726 = vmatpush.bf16.msra.mxu0 %v709
  %727 = vmatpush.bf16.msra.mxu0 %v708
  %728 = vmatpush.bf16.msra.mxu0 %v707
  %729 = vmatpush.bf16.msra.mxu0 %v706
  %730 = vmatmul.bf16.gmra.mxu0 %v530
  %v731 = vpop.f32.mrf.mxu0
  %v732 = vadd.f32 %v665, %v731
  %v733 = vpop.f32.mrf.mxu0
  %v734 = vadd.f32 %v667, %v733
  %735 = vmatmul.bf16.gmra.mxu0 %v531
  %v736 = vpop.f32.mrf.mxu0
  %v737 = vadd.f32 %v670, %v736
  %v738 = vpop.f32.mrf.mxu0
  %v739 = vadd.f32 %v672, %v738
  %740 = vdwg.mxu0
  %s741 = scalar_lea.vmem %s5, 32
  %v742 = vld [vmem:[%s741] sm:$0xf]
  %v743 = vld [vmem:[%s741 + $0x4] sm:$0xf]
  %v744 = vld [vmem:[%s741 + $0x8] sm:$0xf]
  %v745 = vld [vmem:[%s741 + $0xc] sm:$0xf]
  %v750 = vunpack.c.l.b16 %v742
  %v751 = vunpack.c.l.b16 %v743
  %v752 = vunpack.c.l.b16 %v744
  %v753 = vunpack.c.l.b16 %v745
  %v754 = vpack.c.b16 %v751, %v750
  %v755 = vpack.c.b16 %v753, %v752
  %v757 = vsel %vm81, %v754, 0
  %v760 = vsel %vm81, %v755, 0
  %762 = vmatpush.bf16.msra.mxu0 0
  %763 = vmatpush.bf16.msra.mxu0 0
  %764 = vmatpush.bf16.msra.mxu0 0
  %765 = vmatpush.bf16.msra.mxu0 0
  %766 = vmatpush.bf16.msra.mxu0 0
  %767 = vmatpush.bf16.msra.mxu0 0
  %768 = vmatpush.bf16.msra.mxu0 %v490
  %769 = vmatpush.bf16.msra.mxu0 %v489
  %770 = vmatmul.bf16.gmra.mxu0 %v757
  %v771 = vpop.f32.mrf.mxu0
  %v772 = vadd.f32 0.0, %v771
  %v773 = vpop.f32.mrf.mxu0
  %v774 = vadd.f32 0.0, %v773
  %775 = vmatmul.bf16.gmra.mxu0 %v760
  %v776 = vpop.f32.mrf.mxu0
  %v777 = vadd.f32 0.0, %v776
  %v778 = vpop.f32.mrf.mxu0
  %v779 = vadd.f32 0.0, %v778
  %780 = vdwg.mxu0
  %v781 = vpack.c.bf16 %v774, %v772
  %v782 = vpack.c.bf16 %v779, %v777
  %s783 = scalar_lea.vmem %s6, 128
  %v784 = vld [vmem:[%s783] sm:$0xf]
  %v785 = vld [vmem:[%s783 + $0x4] sm:$0xf]
  %v786 = vld [vmem:[%s783 + $0x8] sm:$0xf]
  %v787 = vld [vmem:[%s783 + $0xc] sm:$0xf]
  %v788 = vld [vmem:[%s783 + $0x10] sm:$0xf]
  %v789 = vld [vmem:[%s783 + $0x14] sm:$0xf]
  %v790 = vld [vmem:[%s783 + $0x18] sm:$0xf]
  %v791 = vld [vmem:[%s783 + $0x1c] sm:$0xf]
  %v792 = vld [vmem:[%s783 + $0x20] sm:$0xf]
  %v793 = vld [vmem:[%s783 + $0x24] sm:$0xf]
  %v794 = vld [vmem:[%s783 + $0x28] sm:$0xf]
  %v795 = vld [vmem:[%s783 + $0x2c] sm:$0xf]
  %v796 = vld [vmem:[%s783 + $0x30] sm:$0xf]
  %v797 = vld [vmem:[%s783 + $0x34] sm:$0xf]
  %v798 = vld [vmem:[%s783 + $0x38] sm:$0xf]
  %v799 = vld [vmem:[%s783 + $0x3c] sm:$0xf]
  %v816 = vunpack.c.l.b16 %v784
  %v817 = vunpack.c.l.b16 %v785
  %v818 = vunpack.c.l.b16 %v786
  %v819 = vunpack.c.l.b16 %v787
  %v820 = vunpack.c.l.b16 %v788
  %v821 = vunpack.c.l.b16 %v789
  %v822 = vunpack.c.l.b16 %v790
  %v823 = vunpack.c.l.b16 %v791
  %v824 = vunpack.c.l.b16 %v792
  %v825 = vunpack.c.l.b16 %v793
  %v826 = vunpack.c.l.b16 %v794
  %v827 = vunpack.c.l.b16 %v795
  %v828 = vunpack.c.l.b16 %v796
  %v829 = vunpack.c.l.b16 %v797
  %v830 = vunpack.c.l.b16 %v798
  %v831 = vunpack.c.l.b16 %v799
  %v832 = vpack.c.b16 %v817, %v816
  %v833 = vpack.c.b16 %v819, %v818
  %v834 = vpack.c.b16 %v821, %v820
  %v835 = vpack.c.b16 %v823, %v822
  %v836 = vpack.c.b16 %v825, %v824
  %v837 = vpack.c.b16 %v827, %v826
  %v838 = vpack.c.b16 %v829, %v828
  %v839 = vpack.c.b16 %v831, %v830
  %848 = vmatpush.bf16.msra.mxu0 %v839
  %849 = vmatpush.bf16.msra.mxu0 %v838
  %850 = vmatpush.bf16.msra.mxu0 %v837
  %851 = vmatpush.bf16.msra.mxu0 %v836
  %852 = vmatpush.bf16.msra.mxu0 %v835
  %853 = vmatpush.bf16.msra.mxu0 %v834
  %854 = vmatpush.bf16.msra.mxu0 %v833
  %855 = vmatpush.bf16.msra.mxu0 %v832
  %856 = vmatmul.bf16.gmra.mxu0 %v781
  %v857 = vpop.f32.mrf.mxu0
  %v858 = vadd.f32 0.0, %v857
  %v859 = vpop.f32.mrf.mxu0
  %v860 = vadd.f32 0.0, %v859
  %861 = vmatmul.bf16.gmra.mxu0 %v782
  %v862 = vpop.f32.mrf.mxu0
  %v863 = vadd.f32 0.0, %v862
  %v864 = vpop.f32.mrf.mxu0
  %v865 = vadd.f32 0.0, %v864
  %866 = vdwg.mxu0
  %v867 = vadd.f32 %v732, %v858
  %v868 = vadd.f32 %v734, %v860
  %v869 = vadd.f32 %v737, %v863
  %v870 = vadd.f32 %v739, %v865
  %v871 = vld [vmem:[%s7] sm:$0x1]
  %v872 = vld [vmem:[%s8] sm:$0x1]
  %873 = vmatpush.msra.mxu0 %v66
  %874 = vmatpush.msra.mxu0 %v65
  %875 = vmatpush.msra.mxu0 %v64
  %876 = vmatpush.msra.mxu0 %v63
  %877 = vmatpush.msra.mxu0 %v62
  %878 = vmatpush.msra.mxu0 %v61
  %879 = vmatpush.msra.mxu0 %v60
  %880 = vmatpush.msra.mxu0 %v59
  %881 = vmatpush.msra.mxu0 %v58
  %882 = vmatpush.msra.mxu0 %v57
  %883 = vmatpush.msra.mxu0 %v56
  %884 = vmatpush.msra.mxu0 %v55
  %885 = vmatpush.msra.mxu0 %v54
  %886 = vmatpush.msra.mxu0 %v53
  %887 = vmatpush.msra.mxu0 %v52
  %888 = vmatpush.msra.mxu0 %v51
  %889 = vmatmul.f32.gmra.mxu0 %v867
  %v890 = vpop.f32.mrf.mxu0
  %v891 = vadd.f32 0.0, %v890
  %892 = vmatmul.f32.gmra.mxu0 %v868
  %v893 = vpop.f32.mrf.mxu0
  %v894 = vadd.f32 0.0, %v893
  %895 = vmatmul.f32.gmra.mxu0 %v869
  %v896 = vpop.f32.mrf.mxu0
  %v897 = vadd.f32 0.0, %v896
  %898 = vmatmul.f32.gmra.mxu0 %v870
  %v899 = vpop.f32.mrf.mxu0
  %v900 = vadd.f32 0.0, %v899
  %901 = vdwg.mxu0
  %v902 = vadd.f32 %v891, %v894
  %v903 = vadd.f32 %v902, %v897
  %v904 = vadd.f32 %v903, %v900
  %v905 = vrot.slane %v904, 4
  %v906 = vadd.f32 %v904, %v905
  %v907 = vrot.slane %v906, 2
  %v908 = vadd.f32 %v906, %v907
  %v909 = vrot.slane %v908, 1
  %v910 = vadd.f32 %v908, %v909
  %v911 = vmul.f32 %v910, 0.001953125
  %v912 = vsub.f32 %v867, %v911
  %v913 = vsub.f32 %v868, %v911
  %v914 = vsub.f32 %v869, %v911
  %v915 = vsub.f32 %v870, %v911
  %v916 = vmul.f32 %v912, %v912
  %v917 = vmul.f32 %v913, %v913
  %v918 = vmul.f32 %v914, %v914
  %v919 = vmul.f32 %v915, %v915
  %920 = vmatpush.msra.mxu0 %v66
  %921 = vmatpush.msra.mxu0 %v65
  %922 = vmatpush.msra.mxu0 %v64
  %923 = vmatpush.msra.mxu0 %v63
  %924 = vmatpush.msra.mxu0 %v62
  %925 = vmatpush.msra.mxu0 %v61
  %926 = vmatpush.msra.mxu0 %v60
  %927 = vmatpush.msra.mxu0 %v59
  %928 = vmatpush.msra.mxu0 %v58
  %929 = vmatpush.msra.mxu0 %v57
  %930 = vmatpush.msra.mxu0 %v56
  %931 = vmatpush.msra.mxu0 %v55
  %932 = vmatpush.msra.mxu0 %v54
  %933 = vmatpush.msra.mxu0 %v53
  %934 = vmatpush.msra.mxu0 %v52
  %935 = vmatpush.msra.mxu0 %v51
  %936 = vmatmul.f32.gmra.mxu0 %v916
  %v937 = vpop.f32.mrf.mxu0
  %v938 = vadd.f32 0.0, %v937
  %939 = vmatmul.f32.gmra.mxu0 %v917
  %v940 = vpop.f32.mrf.mxu0
  %v941 = vadd.f32 0.0, %v940
  %942 = vmatmul.f32.gmra.mxu0 %v918
  %v943 = vpop.f32.mrf.mxu0
  %v944 = vadd.f32 0.0, %v943
  %945 = vmatmul.f32.gmra.mxu0 %v919
  %v946 = vpop.f32.mrf.mxu0
  %v947 = vadd.f32 0.0, %v946
  %948 = vdwg.mxu0
  %v949 = vadd.f32 %v938, %v941
  %v950 = vadd.f32 %v949, %v944
  %v951 = vadd.f32 %v950, %v947
  %v952 = vrot.slane %v951, 4
  %v953 = vadd.f32 %v951, %v952
  %v954 = vrot.slane %v953, 2
  %v955 = vadd.f32 %v953, %v954
  %v956 = vrot.slane %v955, 1
  %v957 = vadd.f32 %v955, %v956
  %v958 = vmul.f32 %v957, 0.001953125
  %v959 = vadd.f32 %v958, 1e-05
  %v960 = vrsqrt.pop %v959
  %v961 = vmul.f32 %v960, %v959
  %v962 = vmul.f32 %v961, %v960
  %v963 = vmul.f32 0.5, %v962
  %v964 = vsub.f32 1.5, %v963
  %v965 = vmul.f32 %v960, %v964
  %vm966 = vweird.f32 %v959
  %vm967 = vweird.f32 %v960
  %vm968 = vmor %vm966, %vm967
  %v969 = vsel %vm968, %v960, %v965
  %v970 = vmul.f32 %v871, %v969
  %v972 = vperm.slane %v970, 0
  %v974 = vmul.f32 %v912, %v972
  %v975 = vmul.f32 %v913, %v972
  %v976 = vmul.f32 %v914, %v972
  %v977 = vmul.f32 %v915, %v972
  %v979 = vperm.slane %v872, 0
  %v981 = vadd.f32 %v974, %v979
  %v982 = vadd.f32 %v975, %v979
  %v983 = vadd.f32 %v976, %v979
  %v984 = vadd.f32 %v977, %v979
  %v985 = vld [vmem:[%s10] sm:$0xf]
  %v986 = vld [vmem:[%s10 + $0x4] sm:$0xf]
  %v987 = vld [vmem:[%s10 + $0x8] sm:$0xf]
  %v988 = vld [vmem:[%s10 + $0xc] sm:$0xf]
  %v989 = vld [vmem:[%s10 + $0x10] sm:$0xf]
  %v990 = vld [vmem:[%s10 + $0x14] sm:$0xf]
  %v991 = vld [vmem:[%s10 + $0x18] sm:$0xf]
  %v992 = vld [vmem:[%s10 + $0x1c] sm:$0xf]
  %v1001 = vunpack.c.l.b16 %v985
  %v1002 = vunpack.c.l.b16 %v986
  %v1003 = vunpack.c.l.b16 %v987
  %v1004 = vunpack.c.l.b16 %v988
  %v1005 = vunpack.c.l.b16 %v989
  %v1006 = vunpack.c.l.b16 %v990
  %v1007 = vunpack.c.l.b16 %v991
  %v1008 = vunpack.c.l.b16 %v992
  %v1009 = vpack.c.b16 %v1002, %v1001
  %v1010 = vpack.c.b16 %v1004, %v1003
  %v1011 = vpack.c.b16 %v1006, %v1005
  %v1012 = vpack.c.b16 %v1008, %v1007
  %1017 = vmatpush.bf16.msra.mxu0 0
  %1018 = vmatpush.bf16.msra.mxu0 0
  %1019 = vmatpush.bf16.msra.mxu0 0
  %1020 = vmatpush.bf16.msra.mxu0 0
  %1021 = vmatpush.bf16.msra.mxu0 %v1012
  %1022 = vmatpush.bf16.msra.mxu0 %v1011
  %1023 = vmatpush.bf16.msra.mxu0 %v1010
  %1024 = vmatpush.bf16.msra.mxu0 %v1009
  %1025 = vmatmul.bf16.gmra.mxu0 %v194
  %v1026 = vpop.f32.mrf.mxu0
  %v1027 = vadd.f32 0.0, %v1026
  %v1028 = vpop.f32.mrf.mxu0
  %v1029 = vadd.f32 0.0, %v1028
  %1030 = vmatmul.bf16.gmra.mxu0 %v197
  %v1031 = vpop.f32.mrf.mxu0
  %v1032 = vadd.f32 0.0, %v1031
  %v1033 = vpop.f32.mrf.mxu0
  %v1034 = vadd.f32 0.0, %v1033
  %1035 = vdwg.mxu0
  %v1036 = vld [vmem:[%s11] sm:$0x1]
  %v1037 = vld [vmem:[%s12] sm:$0x1]
  %1038 = vmatpush.msra.mxu0 %v66
  %1039 = vmatpush.msra.mxu0 %v65
  %1040 = vmatpush.msra.mxu0 %v64
  %1041 = vmatpush.msra.mxu0 %v63
  %1042 = vmatpush.msra.mxu0 %v62
  %1043 = vmatpush.msra.mxu0 %v61
  %1044 = vmatpush.msra.mxu0 %v60
  %1045 = vmatpush.msra.mxu0 %v59
  %1046 = vmatpush.msra.mxu0 %v58
  %1047 = vmatpush.msra.mxu0 %v57
  %1048 = vmatpush.msra.mxu0 %v56
  %1049 = vmatpush.msra.mxu0 %v55
  %1050 = vmatpush.msra.mxu0 %v54
  %1051 = vmatpush.msra.mxu0 %v53
  %1052 = vmatpush.msra.mxu0 %v52
  %1053 = vmatpush.msra.mxu0 %v51
  %1054 = vmatmul.f32.gmra.mxu0 %v1027
  %v1055 = vpop.f32.mrf.mxu0
  %v1056 = vadd.f32 0.0, %v1055
  %1057 = vmatmul.f32.gmra.mxu0 %v1029
  %v1058 = vpop.f32.mrf.mxu0
  %v1059 = vadd.f32 0.0, %v1058
  %1060 = vmatmul.f32.gmra.mxu0 %v1032
  %v1061 = vpop.f32.mrf.mxu0
  %v1062 = vadd.f32 0.0, %v1061
  %1063 = vmatmul.f32.gmra.mxu0 %v1034
  %v1064 = vpop.f32.mrf.mxu0
  %v1065 = vadd.f32 0.0, %v1064
  %1066 = vdwg.mxu0
  %v1067 = vadd.f32 %v1056, %v1059
  %v1068 = vadd.f32 %v1067, %v1062
  %v1069 = vadd.f32 %v1068, %v1065
  %v1070 = vrot.slane %v1069, 4
  %v1071 = vadd.f32 %v1069, %v1070
  %v1072 = vrot.slane %v1071, 2
  %v1073 = vadd.f32 %v1071, %v1072
  %v1074 = vrot.slane %v1073, 1
  %v1075 = vadd.f32 %v1073, %v1074
  %v1076 = vmul.f32 %v1075, 0.001953125
  %v1077 = vsub.f32 %v1027, %v1076
  %v1078 = vsub.f32 %v1029, %v1076
  %v1079 = vsub.f32 %v1032, %v1076
  %v1080 = vsub.f32 %v1034, %v1076
  %v1081 = vmul.f32 %v1077, %v1077
  %v1082 = vmul.f32 %v1078, %v1078
  %v1083 = vmul.f32 %v1079, %v1079
  %v1084 = vmul.f32 %v1080, %v1080
  %1085 = vmatpush.msra.mxu0 %v66
  %1086 = vmatpush.msra.mxu0 %v65
  %1087 = vmatpush.msra.mxu0 %v64
  %1088 = vmatpush.msra.mxu0 %v63
  %1089 = vmatpush.msra.mxu0 %v62
  %1090 = vmatpush.msra.mxu0 %v61
  %1091 = vmatpush.msra.mxu0 %v60
  %1092 = vmatpush.msra.mxu0 %v59
  %1093 = vmatpush.msra.mxu0 %v58
  %1094 = vmatpush.msra.mxu0 %v57
  %1095 = vmatpush.msra.mxu0 %v56
  %1096 = vmatpush.msra.mxu0 %v55
  %1097 = vmatpush.msra.mxu0 %v54
  %1098 = vmatpush.msra.mxu0 %v53
  %1099 = vmatpush.msra.mxu0 %v52
  %1100 = vmatpush.msra.mxu0 %v51
  %1101 = vmatmul.f32.gmra.mxu0 %v1081
  %v1102 = vpop.f32.mrf.mxu0
  %v1103 = vadd.f32 0.0, %v1102
  %1104 = vmatmul.f32.gmra.mxu0 %v1082
  %v1105 = vpop.f32.mrf.mxu0
  %v1106 = vadd.f32 0.0, %v1105
  %1107 = vmatmul.f32.gmra.mxu0 %v1083
  %v1108 = vpop.f32.mrf.mxu0
  %v1109 = vadd.f32 0.0, %v1108
  %1110 = vmatmul.f32.gmra.mxu0 %v1084
  %v1111 = vpop.f32.mrf.mxu0
  %v1112 = vadd.f32 0.0, %v1111
  %1113 = vdwg.mxu0
  %v1114 = vadd.f32 %v1103, %v1106
  %v1115 = vadd.f32 %v1114, %v1109
  %v1116 = vadd.f32 %v1115, %v1112
  %v1117 = vrot.slane %v1116, 4
  %v1118 = vadd.f32 %v1116, %v1117
  %v1119 = vrot.slane %v1118, 2
  %v1120 = vadd.f32 %v1118, %v1119
  %v1121 = vrot.slane %v1120, 1
  %v1122 = vadd.f32 %v1120, %v1121
  %v1123 = vmul.f32 %v1122, 0.001953125
  %v1124 = vadd.f32 %v1123, 1e-05
  %v1125 = vrsqrt.pop %v1124
  %v1126 = vmul.f32 %v1125, %v1124
  %v1127 = vmul.f32 %v1126, %v1125
  %v1128 = vmul.f32 0.5, %v1127
  %v1129 = vsub.f32 1.5, %v1128
  %v1130 = vmul.f32 %v1125, %v1129
  %vm1131 = vweird.f32 %v1124
  %vm1132 = vweird.f32 %v1125
  %vm1133 = vmor %vm1131, %vm1132
  %v1134 = vsel %vm1133, %v1125, %v1130
  %v1135 = vmul.f32 %v1036, %v1134
  %v1137 = vperm.slane %v1135, 0
  %v1139 = vmul.f32 %v1077, %v1137
  %v1140 = vmul.f32 %v1078, %v1137
  %v1141 = vmul.f32 %v1079, %v1137
  %v1142 = vmul.f32 %v1080, %v1137
  %v1144 = vperm.slane %v1037, 0
  %v1146 = vadd.f32 %v1139, %v1144
  %v1147 = vadd.f32 %v1140, %v1144
  %v1148 = vadd.f32 %v1141, %v1144
  %v1149 = vadd.f32 %v1142, %v1144
  %v1150 = vadd.f32 %v981, %v1146
  %v1151 = vadd.f32 %v982, %v1147
  %v1152 = vadd.f32 %v983, %v1148
  %v1153 = vadd.f32 %v984, %v1149
  %v1154 = vmax.f32 %v1150, 0.0
  %v1155 = vmax.f32 %v1151, 0.0
  %v1156 = vmax.f32 %v1152, 0.0
  %v1157 = vmax.f32 %v1153, 0.0
  %1158 = vst [vmem:[%s13] sm:$0xff] %v1154
  %1159 = vst [vmem:[%s13 + $0x8] sm:$0xff] %v1155
  %1160 = vst [vmem:[%s13 + $0x10] sm:$0xff] %v1156
  %1161 = vst [vmem:[%s13 + $0x18] sm:$0xff] %v1157
  // Predicated region
  $region54: #{_basic_block_impl.1} parent=0 // pred_check
    _
  $region55: #{_basic_block_impl.1} parent=0 // pred_check_branch
    %1163 = sbr.rel (0) target = $region57
  $region56: #{_basic_block_impl.1} parent=0 // pred_region
    _
  $region57: #{_basic_block_impl.1} parent=0 // pred_fallthru
    _
  // Predicated region
  $region58: #{_basic_block_impl.1} parent=0 // pred_check
    _
  $region59: #{_basic_block_impl.1} parent=0 // pred_check_branch
    %1165 = sbr.rel (0) target = $region61
  $region60: #{_basic_block_impl.1} parent=0 // pred_region
    _
  $region61: #{_basic_block_impl.1} parent=0 // pred_fallthru
    _

</llo_original>
